<compile_context>
chip_gen: v5e
topology: v5e:2x2
jax: 0.10.0
libtpu: 0.0.40
codegen_flags: <defaults>
</compile_context>

<pallas_src>
import jax
import jax.numpy as jnp
from jax.experimental import pallas as pl
from jax.experimental.pallas import tpu as pltpu


def _log_iou_cost_kernel(iou_ref, out_ref):
    # Elementwise -log(x). Upcast to f32 so the transcendental stays on the fast EUP
    # path even for bf16 inputs (v5e has no bf16 EUP/VPU path).
    x32 = iou_ref[...].astype(jnp.float32)
    out_ref[...] = (-jnp.log(x32)).astype(out_ref.dtype)


def _choose_block_rows(rows_total: int, max_block_rows: int) -> int:
    # Biggest block that still leaves >=2 grid steps when possible (v7x dual-TC /
    # megacore sharding of the "parallel" axis). Keep it a multiple of 8 (sublane tile).
    half = -(-rows_total // 2)               # ceil(rows/2)
    half = max(8, (half // 8) * 8)           # round down to multiple of 8, min 8
    return min(max_block_rows, half)


def log_iou_cost(
    iou: jax.Array,
    *,
    lane_width: int = 512,          # lane-dense last dim (multiple of 128)
    max_block_rows: int = 1024,     # 1024 x 512 f32 = 2 MiB per block
    small_n_threshold: int = 32768, # below this, plain XLA is strictly faster
) -> jax.Array:
    """Pallas TPU implementation of LogIoUCost.forward: loss = -log(IoU), shape (n,)."""
    assert iou.ndim == 1, "IoU must be a 1-D tensor of shape (n,)"
    n = iou.shape[0]

    # Small-n fast path: pallas_call launch + pipeline prologue/epilogue dwarfs the
    # nanoseconds of actual work for small cost matrices.
    if n < small_n_threshold:
        return -jnp.log(iou)

    # Pad only the remainder (<= lane_width - 1 elements) so the 1-D array reshapes to a
    # lane-dense 2-D slab. Pad value 1.0 -> -log(1) = 0, sliced off at the end.
    rows_total = pl.cdiv(n, lane_width)
    n_pad = rows_total * lane_width
    pad = n_pad - n
    iou_padded = jnp.pad(iou, (0, pad), constant_values=1.0) if pad else iou
    iou_2d = iou_padded.reshape(rows_total, lane_width)

    block_rows = _choose_block_rows(rows_total, max_block_rows)
    grid = pl.cdiv(rows_total, block_rows)

    itemsize = jnp.dtype(iou.dtype).itemsize
    cost = pl.CostEstimate(
        flops=n_pad,                       # the negate
        transcendentals=n_pad,             # the log
        bytes_accessed=2 * n_pad * itemsize,
    )

    out_2d = pl.pallas_call(
        _log_iou_cost_kernel,
        out_shape=jax.ShapeDtypeStruct((rows_total, lane_width), iou.dtype),
        grid_spec=pltpu.PrefetchScalarGridSpec(
            num_scalar_prefetch=0,
            grid=(grid,),
            # Boundary block may be partial: OOB input rows read garbage (possibly NaN
            # after -log) but their output rows are masked on store -> harmless.
            in_specs=[pl.BlockSpec((block_rows, lane_width), lambda i: (i, 0))],
            out_specs=pl.BlockSpec((block_rows, lane_width), lambda i: (i, 0)),
        ),
        compiler_params=pltpu.CompilerParams(
            dimension_semantics=("parallel",),
            # If the caller jits this wrapper, let XLA fuse the small pad/reshape into
            # the pallas_call input instead of materializing it in HBM.
            allow_input_fusion=[True],
        ),
        cost_estimate=cost,
    )(iou_2d)

    out_flat = out_2d.reshape(-1)
    return out_flat if pad == 0 else out_flat[:n]


if __name__ == "__main__":
    key = jax.random.PRNGKey(0)
    k_small, k_large = jax.random.split(key)

    # 1) Small-n fast path (typical small cost matrix).
    n_small = 300
    iou_small = jax.random.uniform(
        k_small, (n_small,), dtype=jnp.float32, minval=1e-3, maxval=1.0
    )
    loss_small = jax.block_until_ready(log_iou_cost(iou_small))
    ref_small = -jnp.log(iou_small)
    assert loss_small.shape == (n_small,)
    assert jnp.allclose(loss_small, ref_small, rtol=1e-6, atol=1e-6)

    # 2) Larger, non-multiple-of-512 length -> exercises the Pallas path, the edge pad,
    #    and a partial boundary grid block.
    n_large = 50_000
    iou_large = jax.random.uniform(
        k_large, (n_large,), dtype=jnp.float32, minval=1e-3, maxval=1.0
    )
    loss_large = jax.block_until_ready(log_iou_cost(iou_large))
    ref_large = -jnp.log(iou_large)
    assert loss_large.shape == (n_large,)
    assert jnp.allclose(loss_large, ref_large, rtol=1e-6, atol=1e-6)

    print("KERNEL_OK")
</pallas_src>

<mosaic_0001>
module attributes {stable_mosaic.version = 11 : i64} {
  func.func @_log_iou_cost_kernel(%arg0: i32, %arg1: memref<48x512xf32, #tpu.memory_space<vmem>>, %arg2: memref<48x512xf32, #tpu.memory_space<vmem>>) attributes {dimension_semantics = [#tpu.dimension_semantics<parallel>], iteration_bounds = array<i64: 3>, scalar_prefetch = 0 : i64, scratch_operands = 0 : i64, tpu.core_type = #tpu.core_type<tc>, window_params = [{transform_indices = @transform_0, window_bounds = array<i64: 48, 512>}, {transform_indices = @transform_1, window_bounds = array<i64: 48, 512>}]} {
    %c0 = arith.constant 0 : index
    %c0_0 = arith.constant 0 : index
    %0 = vector.load %arg1[%c0, %c0_0] : memref<48x512xf32, #tpu.memory_space<vmem>>, vector<48x512xf32>
    %1 = math.log %0 : vector<48x512xf32>
    %cst = arith.constant 0.000000e+00 : f32
    %2 = vector.broadcast %cst : f32 to vector<48x512xf32>
    %3 = arith.subf %2, %1 : vector<48x512xf32>
    %c0_1 = arith.constant 0 : index
    %c0_2 = arith.constant 0 : index
    %4 = vector.load %arg2[%c0_1, %c0_2] : memref<48x512xf32, #tpu.memory_space<vmem>>, vector<48x512xf32>
    tpu.vector_store %arg2[%c0_1, %c0_2], %3 {strides = array<i32>} : memref<48x512xf32, #tpu.memory_space<vmem>>, vector<48x512xf32>,
    return
  }
  func.func @transform_0(%arg0: i32) -> (i32, i32) {
    %c0_i32 = arith.constant 0 : i32
    %c0_i32_0 = arith.constant 0 : i32
    return %arg0, %c0_i32 : i32, i32
  }
  func.func @transform_1(%arg0: i32) -> (i32, i32) {
    %c0_i32 = arith.constant 0 : i32
    %c0_i32_0 = arith.constant 0 : i32
    return %arg0, %c0_i32 : i32, i32
  }
}

</mosaic_0001>

<llo_original>
// kernel: tpu_custom_call.1
$region0: #{tpu_custom_call.1}
  #allocation0 [shape = 'u32[]', space=smem, size = 0x4, offset = 0x4, fixed_abs, tag = 'smem constant byte address 0x4 - core index']
  #allocation1 [shape = 'u32[72,128]{1,0:T(1,128)}', space=vmem, size = 0x9000, scoped, tag = 'internal scratch']
  %s0 = inlined_call_operand.hbm [shape: f32[98,512], index: 0, kind: input, shape index: {}]
  %s1 = inlined_call_operand.hbm [shape: f32[98,512], index: 1, kind: output, shape index: {}]
  %s2 = sld [smem:[#allocation0]]
  $region41: #{tpu_custom_call.1} parent=0
    _
  %s4 = ssub.s32 1, %s2
  %s5 = scalar_select 0, %s4, %s2
  $region1: #{tpu_custom_call.1} parent=0
    #allocation2 [shape = 'u8[196608]{0}', space=vmem, size = 0x30000, scoped, tag = 'input window, operand 0']
    #allocation3 [shape = 's32[2]{0}', space=sflag, size = 0x8, scoped, tag = 'scoped memory for tpu_custom_call.1']
    #allocation4 [shape = 's32[2]{0}', space=sflag, size = 0x8, scoped, tag = 'scoped memory for tpu_custom_call.1']
    #allocation5 [shape = 'u8[196608]{0}', space=vmem, size = 0x30000, scoped, tag = 'output window, operand 0']
    %6 = vsyncpa [#allocation3], 0
    %s7 = scalar_lea.sflag [#allocation3], 1
    %8 = vsyncpa %s7, 0
    %9 = vsyncpa [#allocation4], 0
    %s10 = scalar_lea.sflag [#allocation4], 1
    %11 = vsyncpa %s10, 0
    loop: start=0, step=1, limit=5
    $region2: #{tpu_custom_call.1} parent=1 // loop_pre_header
      _
    $region3: #{tpu_custom_call.1} parent=1 // loop_header
      %s13 = sphi 0, %s17
      %p14 = scmp.ge.s32.totalorder %s13, 5
      %s23 = sphi 0, %s25
      %s26 = sphi 0, %s23
      %s27 = sphi 0, %s26
      %s43 = sphi 0, %s27
      %s49 = sphi 0, %s51
      %s52 = sphi 0, %s49
      %s53 = sphi 0, %s52
      %s69 = sphi 0, %s53
    $region4: #{tpu_custom_call.1} parent=1 // loop_header_branch
      %16 = sbr.rel (%p14) target = $region8
    $region5: #{tpu_custom_call.1} parent=1 // loop_body
      %s18 = ssub.s32 %s13, 1
      %s19 = ssub.s32 %s13, 2
      %s20 = sadd.s32 %s13, 1
      %s21 = ssub.s32 %s13, %s20
      %p22 = scmp.eq.s32.totalorder %s21, 0
      %s24 = sadd.s32 %s23, 1
      %s25 = scalar_select %p22, %s23, %s24
      %p28 = pneg %p22
      %p29 = scmp.eq.s32.totalorder %s13, 2
      %p30 = por %p28, %p29
      %p31 = scmp.ne.s32.totalorder %s23, %s26
      %p32 = scmp.eq.s32.totalorder %s13, 0
      %p33 = por %p31, %p32
      %p34 = scmp.ne.s32.totalorder %s23, %s26
      %p35 = scmp.eq.s32.totalorder %s18, 2
      %p36 = por %p34, %p35
      %p37 = scmp.ne.s32.totalorder %s26, %s27
      %p38 = scmp.eq.s32.totalorder %s18, 0
      %p39 = por %p37, %p38
      %p40 = scmp.ne.s32.totalorder %s26, %s27
      %p41 = scmp.eq.s32.totalorder %s19, 2
      %p42 = por %p40, %p41
      %p44 = scmp.ne.s32.totalorder %s27, %s43
      %p45 = scmp.eq.s32.totalorder %s19, 0
      %p46 = por %p44, %p45
      %s47 = ssub.s32 %s13, %s20
      %p48 = scmp.eq.s32.totalorder %s47, 0
      %s50 = sadd.s32 %s49, 1
      %s51 = scalar_select %p48, %s49, %s50
      %p54 = pneg %p48
      %p55 = scmp.eq.s32.totalorder %s13, 2
      %p56 = por %p54, %p55
      %p57 = scmp.ne.s32.totalorder %s49, %s52
      %p58 = scmp.eq.s32.totalorder %s13, 0
      %p59 = por %p57, %p58
      %p60 = scmp.ne.s32.totalorder %s49, %s52
      %p61 = scmp.eq.s32.totalorder %s18, 2
      %p62 = por %p60, %p61
      %p63 = scmp.ne.s32.totalorder %s52, %s53
      %p64 = scmp.eq.s32.totalorder %s18, 0
      %p65 = por %p63, %p64
      %p66 = scmp.ne.s32.totalorder %s52, %s53
      %p67 = scmp.eq.s32.totalorder %s19, 2
      %p68 = por %p66, %p67
      %p70 = scmp.ne.s32.totalorder %s53, %s69
      %p71 = scmp.eq.s32.totalorder %s19, 0
      %p72 = por %p70, %p71
      %p73 = scmp.le.s32.totalorder 1, %s13
      %p74 = scmp.lt.s32.totalorder %s13, 4
      %p75 = pnand %p73, %p74
      %p76 = pneg %p75
      // Predicated region
      $region9: #{tpu_custom_call.1} parent=5 // pred_check
        _
      $region10: #{tpu_custom_call.1} parent=5 // pred_check_branch
        %78 = sbr.rel (%p75) target = $region12
      $region11: #{tpu_custom_call.1} parent=5 // pred_region
        %s79 = ssub.s32 %s13, 1
      $region12: #{tpu_custom_call.1} parent=5 // pred_fallthru
        _
      %p80 = scmp.lt.s32.totalorder %s13, 3
      // Predicated region
      $region13: #{tpu_custom_call.1} parent=5 // pred_check
        %p81 = pneg %p80
      $region14: #{tpu_custom_call.1} parent=5 // pred_check_branch
        %83 = sbr.rel (%p81) target = $region16
      $region15: #{tpu_custom_call.1} parent=5 // pred_region
        // Predicated region
        $region17: #{tpu_custom_call.1} parent=15 // pred_check
          %p84 = pneg %p33
        $region18: #{tpu_custom_call.1} parent=15 // pred_check_branch
          %86 = sbr.rel (%p84) target = $region20
        $region19: #{tpu_custom_call.1} parent=15 // pred_region
          %s87 = sand.u32 %s23, 1
          %s88 = scalar_lea.sflag [#allocation3], %s87
          %s89 = sand.u32 %s23, 1
          %s90 = smul.addr %s89, 192
          %s91 = scalar_lea.vmem [#allocation2], %s90
          %s92 = smul.u32 6, %s13
          %s93 = ssub.s32 13, %s92
          %p94 = scmp.lt.s32.totalorder %s93, 6
          %s95 = scalar_select %p94, %s93, 6
          %s96 = smul.u32 8, %s95
          %s97 = smul.u32 %s96, 4
          %s98 = ssub.s32 192, %s97
          %s99 = sshll.u32 %s98, 4
          %100 = vsyncadd %s88, %s99
          %p101 = scmp.ne.s32.totalorder 0, %s97
          %s102 = smul.addr %s92, 4
          %s103 = smul.addr %s102, 8
          %s104 = scalar_lea.hbm %s0, %s103
          %s105 = smul.u32 32, %s95
          %s106 = sshll.u32 %s104, 4
          %s107 = int_to_ptr.hbm [resolvable:$true] %s106
          %s108 = sshll.u32 %s91, 4
          %s109 = int_to_ptr.vmem [resolvable:$true] %s108
          %s110 = sshll.u32 %s105, 4
          %114 = dma.hbm_to_vmem [thread:$0]  (%p101), %s107, %s110, %s109, %s88, 512, 512, 32
        $region20: #{tpu_custom_call.1} parent=15 // pred_fallthru
          _
      $region16: #{tpu_custom_call.1} parent=5 // pred_fallthru
        _
      %p115 = scmp.le.s32.totalorder 1, %s13
      %p116 = scmp.lt.s32.totalorder %s13, 4
      %p117 = pnand %p115, %p116
      %p118 = pneg %p117
      // Predicated region
      $region21: #{tpu_custom_call.1} parent=5 // pred_check
        _
      $region22: #{tpu_custom_call.1} parent=5 // pred_check_branch
        %120 = sbr.rel (%p117) target = $region24
      $region23: #{tpu_custom_call.1} parent=5 // pred_region
        %s121 = ssub.s32 %s13, 1
        %s122 = sand.u32 %s26, 1
        %s123 = scalar_lea.sflag [#allocation3], %s122
        %s124 = sand.u32 %s26, 1
        %s125 = smul.addr %s124, 192
        %s126 = scalar_lea.vmem [#allocation2], %s125
        // Predicated region
        $region25: #{tpu_custom_call.1} parent=23 // pred_check
          %p127 = pneg %p39
        $region26: #{tpu_custom_call.1} parent=23 // pred_check_branch
          %129 = sbr.rel (%p127) target = $region28
        $region27: #{tpu_custom_call.1} parent=23 // pred_region
          %131 = dma.done %s123, 3072
        $region28: #{tpu_custom_call.1} parent=23 // pred_fallthru
          _
        %s132 = sand.u32 %s26, 1
        %s133 = scalar_lea.sflag [#allocation3], %s132
        %s134 = sand.u32 %s26, 1
        %s135 = smul.addr %s134, 192
        %s136 = scalar_lea.vmem [#allocation2], %s135
        %p137 = pneg %p39
        %p138 = pneg %p36
        %p139 = pneg %p65
        %p140 = pneg %p62
        %s141 = sand.u32 %s52, 1
        %s142 = scalar_lea.sflag [#allocation4], %s141
        %s143 = sand.u32 %s52, 1
        %s144 = smul.addr %s143, 192
        %s145 = scalar_lea.vmem [#allocation5], %s144
        %s146 = smul.u32 6, %s18
        %s147 = ssub.s32 13, %s146
        %p148 = scmp.lt.s32.totalorder %s147, 6
        %s149 = scalar_select %p148, %s147, 6
        %s150 = smul.u32 8, %s149
        %s151 = smul.u32 %s150, 4
        %s152 = smul.u32 6, %s18
        %s153 = ssub.s32 13, %s152
        %p154 = scmp.lt.s32.totalorder %s153, 6
        %s155 = scalar_select %p154, %s153, 6
        %s156 = smul.u32 8, %s155
        %s157 = smul.u32 %s156, 4
        %v158 = vld [vmem:[%s126] sm:$0xff]
        %v159 = vld [vmem:[%s126 + $0x8] sm:$0xff]
        %v160 = vld [vmem:[%s126 + $0x10] sm:$0xff]
        %v161 = vld [vmem:[%s126 + $0x18] sm:$0xff]
        %v162 = vld [vmem:[%s126 + $0x20] sm:$0xff]
        %v163 = vld [vmem:[%s126 + $0x28] sm:$0xff]
        %v164 = vld [vmem:[%s126 + $0x30] sm:$0xff]
        %v165 = vld [vmem:[%s126 + $0x38] sm:$0xff]
        %v166 = vld [vmem:[%s126 + $0x40] sm:$0xff]
        %v167 = vld [vmem:[%s126 + $0x48] sm:$0xff]
        %v168 = vld [vmem:[%s126 + $0x50] sm:$0xff]
        %v169 = vld [vmem:[%s126 + $0x58] sm:$0xff]
        %v170 = vld [vmem:[%s126 + $0x60] sm:$0xff]
        %v171 = vld [vmem:[%s126 + $0x68] sm:$0xff]
        %v172 = vld [vmem:[%s126 + $0x70] sm:$0xff]
        %v173 = vld [vmem:[%s126 + $0x78] sm:$0xff]
        %v174 = vld [vmem:[%s126 + $0x80] sm:$0xff]
        %v175 = vld [vmem:[%s126 + $0x88] sm:$0xff]
        %v176 = vld [vmem:[%s126 + $0x90] sm:$0xff]
        %v177 = vld [vmem:[%s126 + $0x98] sm:$0xff]
        %v178 = vld [vmem:[%s126 + $0xa0] sm:$0xff]
        %v179 = vld [vmem:[%s126 + $0xa8] sm:$0xff]
        %v180 = vld [vmem:[%s126 + $0xb0] sm:$0xff]
        %v181 = vld [vmem:[%s126 + $0xb8] sm:$0xff]
        %v182 = vlog2.pop %v158
        %v183 = vmul.f32 %v182, 0.6931472
        %v184 = vlog2.pop %v159
        %v185 = vmul.f32 %v184, 0.6931472
        %v186 = vlog2.pop %v160
        %v187 = vmul.f32 %v186, 0.6931472
        %v188 = vlog2.pop %v161
        %v189 = vmul.f32 %v188, 0.6931472
        %v190 = vlog2.pop %v162
        %v191 = vmul.f32 %v190, 0.6931472
        %v192 = vlog2.pop %v163
        %v193 = vmul.f32 %v192, 0.6931472
        %v194 = vlog2.pop %v164
        %v195 = vmul.f32 %v194, 0.6931472
        %v196 = vlog2.pop %v165
        %v197 = vmul.f32 %v196, 0.6931472
        %v198 = vlog2.pop %v166
        %v199 = vmul.f32 %v198, 0.6931472
        %v200 = vlog2.pop %v167
        %v201 = vmul.f32 %v200, 0.6931472
        %v202 = vlog2.pop %v168
        %v203 = vmul.f32 %v202, 0.6931472
        %v204 = vlog2.pop %v169
        %v205 = vmul.f32 %v204, 0.6931472
        %v206 = vlog2.pop %v170
        %v207 = vmul.f32 %v206, 0.6931472
        %v208 = vlog2.pop %v171
        %v209 = vmul.f32 %v208, 0.6931472
        %v210 = vlog2.pop %v172
        %v211 = vmul.f32 %v210, 0.6931472
        %v212 = vlog2.pop %v173
        %v213 = vmul.f32 %v212, 0.6931472
        %v214 = vlog2.pop %v174
        %v215 = vmul.f32 %v214, 0.6931472
        %v216 = vlog2.pop %v175
        %v217 = vmul.f32 %v216, 0.6931472
        %v218 = vlog2.pop %v176
        %v219 = vmul.f32 %v218, 0.6931472
        %v220 = vlog2.pop %v177
        %v221 = vmul.f32 %v220, 0.6931472
        %v222 = vlog2.pop %v178
        %v223 = vmul.f32 %v222, 0.6931472
        %v224 = vlog2.pop %v179
        %v225 = vmul.f32 %v224, 0.6931472
        %v226 = vlog2.pop %v180
        %v227 = vmul.f32 %v226, 0.6931472
        %v228 = vlog2.pop %v181
        %v229 = vmul.f32 %v228, 0.6931472
        %v230 = vsub.f32 0.0, %v183
        %v231 = vsub.f32 0.0, %v185
        %v232 = vsub.f32 0.0, %v187
        %v233 = vsub.f32 0.0, %v189
        %v234 = vsub.f32 0.0, %v191
        %v235 = vsub.f32 0.0, %v193
        %v236 = vsub.f32 0.0, %v195
        %v237 = vsub.f32 0.0, %v197
        %v238 = vsub.f32 0.0, %v199
        %v239 = vsub.f32 0.0, %v201
        %v240 = vsub.f32 0.0, %v203
        %v241 = vsub.f32 0.0, %v205
        %v242 = vsub.f32 0.0, %v207
        %v243 = vsub.f32 0.0, %v209
        %v244 = vsub.f32 0.0, %v211
        %v245 = vsub.f32 0.0, %v213
        %v246 = vsub.f32 0.0, %v215
        %v247 = vsub.f32 0.0, %v217
        %v248 = vsub.f32 0.0, %v219
        %v249 = vsub.f32 0.0, %v221
        %v250 = vsub.f32 0.0, %v223
        %v251 = vsub.f32 0.0, %v225
        %v252 = vsub.f32 0.0, %v227
        %v253 = vsub.f32 0.0, %v229
        %254 = vst [vmem:[%s145] sm:$0xff] %v230
        %255 = vst [vmem:[%s145 + $0x8] sm:$0xff] %v231
        %256 = vst [vmem:[%s145 + $0x10] sm:$0xff] %v232
        %257 = vst [vmem:[%s145 + $0x18] sm:$0xff] %v233
        %258 = vst [vmem:[%s145 + $0x20] sm:$0xff] %v234
        %259 = vst [vmem:[%s145 + $0x28] sm:$0xff] %v235
        %260 = vst [vmem:[%s145 + $0x30] sm:$0xff] %v236
        %261 = vst [vmem:[%s145 + $0x38] sm:$0xff] %v237
        %262 = vst [vmem:[%s145 + $0x40] sm:$0xff] %v238
        %263 = vst [vmem:[%s145 + $0x48] sm:$0xff] %v239
        %264 = vst [vmem:[%s145 + $0x50] sm:$0xff] %v240
        %265 = vst [vmem:[%s145 + $0x58] sm:$0xff] %v241
        %266 = vst [vmem:[%s145 + $0x60] sm:$0xff] %v242
        %267 = vst [vmem:[%s145 + $0x68] sm:$0xff] %v243
        %268 = vst [vmem:[%s145 + $0x70] sm:$0xff] %v244
        %269 = vst [vmem:[%s145 + $0x78] sm:$0xff] %v245
        %270 = vst [vmem:[%s145 + $0x80] sm:$0xff] %v246
        %271 = vst [vmem:[%s145 + $0x88] sm:$0xff] %v247
        %272 = vst [vmem:[%s145 + $0x90] sm:$0xff] %v248
        %273 = vst [vmem:[%s145 + $0x98] sm:$0xff] %v249
        %274 = vst [vmem:[%s145 + $0xa0] sm:$0xff] %v250
        %275 = vst [vmem:[%s145 + $0xa8] sm:$0xff] %v251
        %276 = vst [vmem:[%s145 + $0xb0] sm:$0xff] %v252
        %277 = vst [vmem:[%s145 + $0xb8] sm:$0xff] %v253
        %s278 = sand.u32 %s52, 1
        %s279 = scalar_lea.sflag [#allocation4], %s278
        %s280 = sand.u32 %s52, 1
        %s281 = smul.addr %s280, 192
        %s282 = scalar_lea.vmem [#allocation5], %s281
        // Predicated region
        $region29: #{tpu_custom_call.1} parent=23 // pred_check
          %p283 = pneg %p62
        $region30: #{tpu_custom_call.1} parent=23 // pred_check_branch
          %285 = sbr.rel (%p283) target = $region32
        $region31: #{tpu_custom_call.1} parent=23 // pred_region
          %s286 = smul.u32 6, %s18
          %s287 = ssub.s32 13, %s286
          %p288 = scmp.lt.s32.totalorder %s287, 6
          %s289 = scalar_select %p288, %s287, 6
          %s290 = smul.u32 8, %s289
          %s291 = smul.u32 %s290, 4
          %s292 = ssub.s32 192, %s291
          %s293 = sshll.u32 %s292, 4
          %294 = vsyncadd %s279, %s293
          %p295 = scmp.ne.s32.totalorder 0, %s291
          %s296 = smul.addr %s286, 4
          %s297 = smul.addr %s296, 8
          %s298 = scalar_lea.hbm %s1, %s297
          %s299 = smul.u32 32, %s289
          %s300 = sshll.u32 %s282, 4
          %s301 = int_to_ptr.vmem [resolvable:$true] %s300
          %s302 = sshll.u32 %s298, 4
          %s303 = int_to_ptr.hbm [resolvable:$true] %s302
          %s304 = sshll.u32 %s299, 4
          %308 = dma.vmem_to_hbm [thread:$0]  (%p295), %s301, %s304, %s303, %s279, 512, 512, 32
        $region32: #{tpu_custom_call.1} parent=23 // pred_fallthru
          _
      $region24: #{tpu_custom_call.1} parent=5 // pred_fallthru
        _
      %p309 = scmp.le.s32.totalorder 2, %s13
      // Predicated region
      $region33: #{tpu_custom_call.1} parent=5 // pred_check
        %p310 = pneg %p309
      $region34: #{tpu_custom_call.1} parent=5 // pred_check_branch
        %312 = sbr.rel (%p310) target = $region36
      $region35: #{tpu_custom_call.1} parent=5 // pred_region
        %s313 = ssub.s32 %s13, 2
        // Predicated region
        $region37: #{tpu_custom_call.1} parent=35 // pred_check
          %p314 = pneg %p68
        $region38: #{tpu_custom_call.1} parent=35 // pred_check_branch
          %316 = sbr.rel (%p314) target = $region40
        $region39: #{tpu_custom_call.1} parent=35 // pred_region
          %s317 = sand.u32 %s53, 1
          %s318 = scalar_lea.sflag [#allocation4], %s317
          %s319 = sand.u32 %s53, 1
          %s320 = smul.addr %s319, 192
          %s321 = scalar_lea.vmem [#allocation5], %s320
          %323 = dma.done %s318, 3072
        $region40: #{tpu_custom_call.1} parent=35 // pred_fallthru
          _
      $region36: #{tpu_custom_call.1} parent=5 // pred_fallthru
        _
    $region6: #{tpu_custom_call.1} parent=1 // loop_footer
      %s17 = sadd.s32 1, %s13
    $region7: #{tpu_custom_call.1} parent=1 // loop_footer_branch
      %12 = sbr.rel target = $region3
    $region8: #{tpu_custom_call.1} parent=1 // loop_exit
      _
    %324 = vsyncpa [#allocation3], 1
    %s325 = scalar_lea.sflag [#allocation3], 1
    %326 = vsyncpa %s325, 1
    %327 = vsyncpa [#allocation4], 1
    %s328 = scalar_lea.sflag [#allocation4], 1
    %329 = vsyncpa %s328, 1

</llo_original>
